<compile_context>
chip_gen: v7x
topology: tpu7x:2x2x1
jax: 0.10.0
libtpu: 0.0.40
codegen_flags: <defaults>
</compile_context>

<pallas_src>
import functools
import math

import jax
import jax.numpy as jnp
from jax.experimental import pallas as pl
from jax.experimental.pallas import tpu as pltpu


def _local_mlp_kernel(x_ref, w1_ref, b1_ref, w2_ref, b2_ref, out_ref, *, neg_slope):
    """One grid step computes one lane-dense column tile of the W+ output.

    Layer 1 (B x d_in x hidden) is negligible vs. streaming the w2 column
    tile, so it is recomputed each step -> no cross-step dependency, grid axis
    is 'parallel'.  Both matmuls feed the MXU bf16 operands, f32 accumulation.
    """
    # Layer 1: x @ w1 + b1  (EqualLinear scales / lr_mul already folded in).
    h = jnp.dot(x_ref[...], w1_ref[...], preferred_element_type=jnp.float32)
    h = h + b1_ref[...]
    # LeakyReLU (PyTorch default negative_slope = 0.01), bf16 for the MXU.
    h = jnp.where(h >= 0.0, h, neg_slope * h).astype(jnp.bfloat16)
    # Layer 2: h @ w2_tile + b2_tile.
    o = jnp.dot(h, w2_ref[...], preferred_element_type=jnp.float32)
    out_ref[...] = (o + b2_ref[...]).astype(out_ref.dtype)


def _pick_output_tile(d_out, hidden, b_pad, *, vmem_budget_bytes=12 * 1024 * 1024):
    """Widest lane-dense (multiple-of-128) divisor of d_out whose streamed
    tiles fit the VMEM budget, preferring an even grid-step count (v7x
    megacore splits the grid 1:1 across its two TensorCores)."""
    if d_out % 128 != 0:
        # Full-extent block is always legal; only reached for unusual shapes.
        return d_out
    # VMEM per output column: double-buffered bf16 w2 tile + f32 out tile.
    per_col = 2 * hidden * 2 + 2 * b_pad * 4
    tn_cap = max(128, (vmem_budget_bytes // per_col) // 128 * 128)
    cands = [t for t in range(128, d_out + 1, 128)
             if d_out % t == 0 and t <= tn_cap]
    if not cands:
        return 128

    def score(t):
        steps = d_out // t
        # An odd step count leaves one v7x TensorCore idle for one step.
        eff = steps if steps % 2 == 0 else steps + 1
        return (eff, steps)

    return min(cands, key=score)


def prepare_local_mlp_params(w1_pt, b1_pt, w2_pt, b2_pt, lr_mul=1.0):
    """One-time param prep: fold EqualLinear scales + lr_mul, transpose to
    [in, out] layout, cast the streamed weights to bf16.

    w1_pt: [hidden, d_in], w2_pt: [d_out, hidden] (PyTorch nn.Linear layout).
    Returns w1 [d_in, hidden] bf16, b1 [1, hidden] f32,
            w2 [hidden, d_out] bf16, b2 [1, d_out] f32.
    """
    d_in = w1_pt.shape[1]
    hidden = w2_pt.shape[1]
    s1 = (1.0 / math.sqrt(d_in)) * lr_mul
    s2 = (1.0 / math.sqrt(hidden)) * lr_mul
    w1 = (w1_pt.T * s1).astype(jnp.bfloat16)
    w2 = (w2_pt.T * s2).astype(jnp.bfloat16)
    b1 = (b1_pt * lr_mul).astype(jnp.float32).reshape(1, -1)
    b2 = (b2_pt * lr_mul).astype(jnp.float32).reshape(1, -1)
    return w1, b1, w2, b2


def local_mlp_forward(x, w1, b1, w2, b2, *, num_w_layers, dim_style,
                      neg_slope=0.01, tn=None, out_dtype=jnp.float32,
                      vmem_budget_bytes=12 * 1024 * 1024):
    """x: [B, dim_component]; w1: [dim_component, hidden] bf16;
    w2: [hidden, num_w*dim_style] bf16; b1/b2: [1, .] f32 (scales pre-folded).
    Returns [B, num_w_layers, dim_style] `out_dtype`."""
    B, d_in = x.shape
    hidden = w1.shape[1]
    d_out = w2.shape[1]
    assert d_out == num_w_layers * dim_style
    assert b1.shape == (1, hidden) and b2.shape == (1, d_out)

    # Pad batch to a sublane multiple of 8 if needed.
    b_pad = ((B + 7) // 8) * 8

    if tn is None:
        tn = _pick_output_tile(d_out, hidden, b_pad,
                               vmem_budget_bytes=vmem_budget_bytes)
    assert d_out % tn == 0, "output tile width must divide num_w*dim_style"
    grid = (d_out // tn,)

    # bf16 streaming of activations/weights; biases stay f32.
    x = x.astype(jnp.bfloat16)
    w1 = w1.astype(jnp.bfloat16)
    w2 = w2.astype(jnp.bfloat16)
    b1 = b1.astype(jnp.float32)
    b2 = b2.astype(jnp.float32)
    if b_pad != B:
        x = jnp.pad(x, ((0, b_pad - B), (0, 0)))

    kernel = functools.partial(_local_mlp_kernel, neg_slope=neg_slope)

    def run(single_buffer_invariants):
        if single_buffer_invariants:
            # Grid-invariant operands (constant index_map) are fetched once;
            # a single VMEM buffer suffices and frees room for the w2 tile.
            inv = functools.partial(pl.BlockSpec, pipeline_mode=pl.Buffered(1))
        else:
            inv = pl.BlockSpec
        return pl.pallas_call(
            kernel,
            out_shape=jax.ShapeDtypeStruct((b_pad, d_out), out_dtype),
            grid_spec=pltpu.PrefetchScalarGridSpec(
                num_scalar_prefetch=0,
                grid=grid,
                in_specs=[
                    inv((b_pad, d_in), lambda j: (0, 0)),    # x       (constant)
                    inv((d_in, hidden), lambda j: (0, 0)),   # w1      (constant)
                    inv((1, hidden), lambda j: (0, 0)),      # b1      (constant)
                    pl.BlockSpec((hidden, tn), lambda j: (0, j)),  # w2 col tile
                    pl.BlockSpec((1, tn), lambda j: (0, j)),       # b2 tile
                ],
                out_specs=pl.BlockSpec((b_pad, tn), lambda j: (0, j)),
            ),
            compiler_params=pltpu.CompilerParams(
                # Independent grid steps -> shardable across TCs on v7x.
                dimension_semantics=("parallel",)),
        )(x, w1, b1, w2, b2)

    try:
        out_flat = run(True)
    except Exception:
        # Robustness fallback if Buffered(1) single-buffering is unsupported
        # by the installed jax version; default double-buffering still fits.
        out_flat = run(False)

    if b_pad != B:
        out_flat = out_flat[:B]
    return out_flat.reshape(B, num_w_layers, dim_style)


def _reference(x, w1, b1, w2, b2, neg_slope=0.01):
    """Pure-JAX reference with the same bf16 streaming/rounding as the kernel."""
    xf = x.astype(jnp.bfloat16).astype(jnp.float32)
    w1f = w1.astype(jnp.bfloat16).astype(jnp.float32)
    w2f = w2.astype(jnp.bfloat16).astype(jnp.float32)
    h = xf @ w1f + b1[0]
    h = jnp.where(h >= 0.0, h, neg_slope * h)
    h = h.astype(jnp.bfloat16).astype(jnp.float32)
    return h @ w2f + b2[0]


if __name__ == "__main__":
    # Small shapes consistent with the module (scaled down from 512/512/18).
    batch = 8
    dim_component = 128
    dim_style = 128
    num_w_layers = 4
    latent_squeeze_ratio = 1
    hidden = dim_style // latent_squeeze_ratio
    d_out = dim_style * num_w_layers
    lr_mul = 1.0

    key = jax.random.PRNGKey(0)
    kx, kw1, kw2, kb1, kb2 = jax.random.split(key, 5)

    x = jax.random.normal(kx, (batch, dim_component), dtype=jnp.float32)

    # EqualLinear init layout: W ~ randn(out, in) / lr_mul, bias [out]
    # (module zero-inits biases; use small random values to exercise the path).
    w1_pt = jax.random.normal(kw1, (hidden, dim_component), jnp.float32) / lr_mul
    w2_pt = jax.random.normal(kw2, (d_out, hidden), jnp.float32) / lr_mul
    b1_pt = 0.1 * jax.random.normal(kb1, (hidden,), jnp.float32)
    b2_pt = 0.1 * jax.random.normal(kb2, (d_out,), jnp.float32)

    # One-time parameter prep: fold scales, transpose, cast weights to bf16.
    w1, b1, w2, b2 = prepare_local_mlp_params(w1_pt, b1_pt, w2_pt, b2_pt,
                                              lr_mul=lr_mul)

    out = local_mlp_forward(x, w1, b1, w2, b2,
                            num_w_layers=num_w_layers, dim_style=dim_style)
    out = jax.block_until_ready(out)

    assert out.shape == (batch, num_w_layers, dim_style)

    ref = _reference(x, w1, b1, w2, b2).reshape(batch, num_w_layers, dim_style)
    assert jnp.allclose(out, ref, atol=2e-3, rtol=2e-3), \
        float(jnp.max(jnp.abs(out - ref)))

    print("KERNEL_OK")
</pallas_src>

<mosaic_0001>
module attributes {stable_mosaic.version = 11 : i64} {
  func.func @_local_mlp_kernel(%arg0: i32, %arg1: memref<8x128xbf16, #tpu.memory_space<vmem>>, %arg2: memref<128x128xbf16, #tpu.memory_space<vmem>>, %arg3: memref<1x128xf32, #tpu.memory_space<vmem>>, %arg4: memref<128x512xbf16, #tpu.memory_space<vmem>>, %arg5: memref<1x512xf32, #tpu.memory_space<vmem>>, %arg6: memref<8x512xf32, #tpu.memory_space<vmem>>) attributes {dimension_semantics = [#tpu.dimension_semantics<parallel>], iteration_bounds = array<i64: 1>, scalar_prefetch = 0 : i64, scratch_operands = 0 : i64, tpu.core_type = #tpu.core_type<tc>, window_params = [{pipeline_mode = #tpu.pipeline_mode<synchronous>, transform_indices = @transform_0, window_bounds = array<i64: 8, 128>}, {pipeline_mode = #tpu.pipeline_mode<synchronous>, transform_indices = @transform_1, window_bounds = array<i64: 128, 128>}, {pipeline_mode = #tpu.pipeline_mode<synchronous>, transform_indices = @transform_2, window_bounds = array<i64: 1, 128>}, {transform_indices = @transform_3, window_bounds = array<i64: 128, 512>}, {transform_indices = @transform_4, window_bounds = array<i64: 1, 512>}, {transform_indices = @transform_5, window_bounds = array<i64: 8, 512>}]} {
    %c0 = arith.constant 0 : index
    %c0_0 = arith.constant 0 : index
    %0 = vector.load %arg1[%c0, %c0_0] : memref<8x128xbf16, #tpu.memory_space<vmem>>, vector<8x128xbf16>
    %c0_1 = arith.constant 0 : index
    %c0_2 = arith.constant 0 : index
    %1 = vector.load %arg2[%c0_1, %c0_2] : memref<128x128xbf16, #tpu.memory_space<vmem>>, vector<128x128xbf16>
    %cst = arith.constant dense<0.000000e+00> : vector<8x128xf32>
    %2 = tpu.matmul %0, %1, %cst {dimension_numbers = #tpu.dot_dimension_numbers<[1], [0], [0], [1], [0, 0, 1, 1], [], []>} : vector<8x128xbf16>, vector<128x128xbf16>, vector<8x128xf32> -> vector<8x128xf32>
    %c0_3 = arith.constant 0 : index
    %c0_4 = arith.constant 0 : index
    %3 = vector.load %arg3[%c0_3, %c0_4] : memref<1x128xf32, #tpu.memory_space<vmem>>, vector<1x128xf32>
    %4 = vector.broadcast %3 : vector<1x128xf32> to vector<8x128xf32>
    %5 = arith.addf %2, %4 : vector<8x128xf32>
    %cst_5 = arith.constant 0.000000e+00 : f32
    %6 = vector.broadcast %cst_5 : f32 to vector<8x128xf32>
    %7 = arith.cmpf oge, %5, %6 : vector<8x128xf32>
    %cst_6 = arith.constant 0.00999999977 : f32
    %8 = vector.broadcast %cst_6 : f32 to vector<8x128xf32>
    %9 = arith.mulf %8, %5 : vector<8x128xf32>
    %10 = arith.select %7, %5, %9 : vector<8x128xi1>, vector<8x128xf32>
    %11 = arith.truncf %10 : vector<8x128xf32> to vector<8x128xbf16>
    %c0_7 = arith.constant 0 : index
    %c0_8 = arith.constant 0 : index
    %12 = vector.load %arg4[%c0_7, %c0_8] : memref<128x512xbf16, #tpu.memory_space<vmem>>, vector<128x512xbf16>
    %cst_9 = arith.constant dense<0.000000e+00> : vector<8x512xf32>
    %13 = tpu.matmul %11, %12, %cst_9 {dimension_numbers = #tpu.dot_dimension_numbers<[1], [0], [0], [1], [0, 0, 1, 1], [], []>} : vector<8x128xbf16>, vector<128x512xbf16>, vector<8x512xf32> -> vector<8x512xf32>
    %c0_10 = arith.constant 0 : index
    %c0_11 = arith.constant 0 : index
    %14 = vector.load %arg5[%c0_10, %c0_11] : memref<1x512xf32, #tpu.memory_space<vmem>>, vector<1x512xf32>
    %15 = vector.broadcast %14 : vector<1x512xf32> to vector<8x512xf32>
    %16 = arith.addf %13, %15 : vector<8x512xf32>
    %c0_12 = arith.constant 0 : index
    %c0_13 = arith.constant 0 : index
    %17 = vector.load %arg6[%c0_12, %c0_13] : memref<8x512xf32, #tpu.memory_space<vmem>>, vector<8x512xf32>
    tpu.vector_store %arg6[%c0_12, %c0_13], %16 {strides = array<i32>} : memref<8x512xf32, #tpu.memory_space<vmem>>, vector<8x512xf32>,
    return
  }
  func.func @transform_0(%arg0: i32) -> (i32, i32) {
    %c0_i32 = arith.constant 0 : i32
    %c0_i32_0 = arith.constant 0 : i32
    %c0_i32_1 = arith.constant 0 : i32
    return %c0_i32, %c0_i32_0 : i32, i32
  }
  func.func @transform_1(%arg0: i32) -> (i32, i32) {
    %c0_i32 = arith.constant 0 : i32
    %c0_i32_0 = arith.constant 0 : i32
    %c0_i32_1 = arith.constant 0 : i32
    return %c0_i32, %c0_i32_0 : i32, i32
  }
  func.func @transform_2(%arg0: i32) -> (i32, i32) {
    %c0_i32 = arith.constant 0 : i32
    %c0_i32_0 = arith.constant 0 : i32
    %c0_i32_1 = arith.constant 0 : i32
    return %c0_i32, %c0_i32_0 : i32, i32
  }
  func.func @transform_3(%arg0: i32) -> (i32, i32) {
    %c0_i32 = arith.constant 0 : i32
    %c0_i32_0 = arith.constant 0 : i32
    return %c0_i32, %arg0 : i32, i32
  }
  func.func @transform_4(%arg0: i32) -> (i32, i32) {
    %c0_i32 = arith.constant 0 : i32
    %c0_i32_0 = arith.constant 0 : i32
    return %c0_i32, %arg0 : i32, i32
  }
  func.func @transform_5(%arg0: i32) -> (i32, i32) {
    %c0_i32 = arith.constant 0 : i32
    %c0_i32_0 = arith.constant 0 : i32
    return %c0_i32, %arg0 : i32, i32
  }
}

module attributes {stable_mosaic.version = 11 : i64} {
  func.func @_local_mlp_kernel(%arg0: i32, %arg1: memref<8x128xbf16, #tpu.memory_space<vmem>>, %arg2: memref<128x128xbf16, #tpu.memory_space<vmem>>, %arg3: memref<1x128xf32, #tpu.memory_space<vmem>>, %arg4: memref<128x512xbf16, #tpu.memory_space<vmem>>, %arg5: memref<1x512xf32, #tpu.memory_space<vmem>>, %arg6: memref<8x512xf32, #tpu.memory_space<vmem>>) attributes {dimension_semantics = [#tpu.dimension_semantics<parallel>], iteration_bounds = array<i64: 1>, scalar_prefetch = 0 : i64, scratch_operands = 0 : i64, tpu.core_type = #tpu.core_type<tc>, window_params = [{pipeline_mode = #tpu.pipeline_mode<synchronous>, transform_indices = @transform_0, window_bounds = array<i64: 8, 128>}, {pipeline_mode = #tpu.pipeline_mode<synchronous>, transform_indices = @transform_1, window_bounds = array<i64: 128, 128>}, {pipeline_mode = #tpu.pipeline_mode<synchronous>, transform_indices = @transform_2, window_bounds = array<i64: 1, 128>}, {transform_indices = @transform_3, window_bounds = array<i64: 128, 512>}, {transform_indices = @transform_4, window_bounds = array<i64: 1, 512>}, {transform_indices = @transform_5, window_bounds = array<i64: 8, 512>}]} {
    %c0 = arith.constant 0 : index
    %c0_0 = arith.constant 0 : index
    %0 = vector.load %arg1[%c0, %c0_0] : memref<8x128xbf16, #tpu.memory_space<vmem>>, vector<8x128xbf16>
    %c0_1 = arith.constant 0 : index
    %c0_2 = arith.constant 0 : index
    %1 = vector.load %arg2[%c0_1, %c0_2] : memref<128x128xbf16, #tpu.memory_space<vmem>>, vector<128x128xbf16>
    %cst = arith.constant dense<0.000000e+00> : vector<8x128xf32>
    %2 = tpu.matmul %0, %1, %cst {dimension_numbers = #tpu.dot_dimension_numbers<[1], [0], [0], [1], [0, 0, 1, 1], [], []>} : vector<8x128xbf16>, vector<128x128xbf16>, vector<8x128xf32> -> vector<8x128xf32>
    %c0_3 = arith.constant 0 : index
    %c0_4 = arith.constant 0 : index
    %3 = vector.load %arg3[%c0_3, %c0_4] : memref<1x128xf32, #tpu.memory_space<vmem>>, vector<1x128xf32>
    %4 = vector.broadcast %3 : vector<1x128xf32> to vector<8x128xf32>
    %5 = arith.addf %2, %4 : vector<8x128xf32>
    %cst_5 = arith.constant 0.000000e+00 : f32
    %6 = vector.broadcast %cst_5 : f32 to vector<8x128xf32>
    %7 = arith.cmpf oge, %5, %6 : vector<8x128xf32>
    %cst_6 = arith.constant 0.00999999977 : f32
    %8 = vector.broadcast %cst_6 : f32 to vector<8x128xf32>
    %9 = arith.mulf %8, %5 : vector<8x128xf32>
    %10 = arith.select %7, %5, %9 : vector<8x128xi1>, vector<8x128xf32>
    %11 = arith.truncf %10 : vector<8x128xf32> to vector<8x128xbf16>
    %c0_7 = arith.constant 0 : index
    %c0_8 = arith.constant 0 : index
    %12 = vector.load %arg4[%c0_7, %c0_8] : memref<128x512xbf16, #tpu.memory_space<vmem>>, vector<128x512xbf16>
    %cst_9 = arith.constant dense<0.000000e+00> : vector<8x512xf32>
    %13 = tpu.matmul %11, %12, %cst_9 {dimension_numbers = #tpu.dot_dimension_numbers<[1], [0], [0], [1], [0, 0, 1, 1], [], []>} : vector<8x128xbf16>, vector<128x512xbf16>, vector<8x512xf32> -> vector<8x512xf32>
    %c0_10 = arith.constant 0 : index
    %c0_11 = arith.constant 0 : index
    %14 = vector.load %arg5[%c0_10, %c0_11] : memref<1x512xf32, #tpu.memory_space<vmem>>, vector<1x512xf32>
    %15 = vector.broadcast %14 : vector<1x512xf32> to vector<8x512xf32>
    %16 = arith.addf %13, %15 : vector<8x512xf32>
    %c0_12 = arith.constant 0 : index
    %c0_13 = arith.constant 0 : index
    %17 = vector.load %arg6[%c0_12, %c0_13] : memref<8x512xf32, #tpu.memory_space<vmem>>, vector<8x512xf32>
    tpu.vector_store %arg6[%c0_12, %c0_13], %16 {strides = array<i32>} : memref<8x512xf32, #tpu.memory_space<vmem>>, vector<8x512xf32>,
    return
  }
  func.func @transform_0(%arg0: i32) -> (i32, i32) {
    %c0_i32 = arith.constant 0 : i32
    %c0_i32_0 = arith.constant 0 : i32
    %c0_i32_1 = arith.constant 0 : i32
    return %c0_i32, %c0_i32_0 : i32, i32
  }
  func.func @transform_1(%arg0: i32) -> (i32, i32) {
    %c0_i32 = arith.constant 0 : i32
    %c0_i32_0 = arith.constant 0 : i32
    %c0_i32_1 = arith.constant 0 : i32
    return %c0_i32, %c0_i32_0 : i32, i32
  }
  func.func @transform_2(%arg0: i32) -> (i32, i32) {
    %c0_i32 = arith.constant 0 : i32
    %c0_i32_0 = arith.constant 0 : i32
    %c0_i32_1 = arith.constant 0 : i32
    return %c0_i32, %c0_i32_0 : i32, i32
  }
  func.func @transform_3(%arg0: i32) -> (i32, i32) {
    %c0_i32 = arith.constant 0 : i32
    %c0_i32_0 = arith.constant 0 : i32
    return %c0_i32, %arg0 : i32, i32
  }
  func.func @transform_4(%arg0: i32) -> (i32, i32) {
    %c0_i32 = arith.constant 0 : i32
    %c0_i32_0 = arith.constant 0 : i32
    return %c0_i32, %arg0 : i32, i32
  }
  func.func @transform_5(%arg0: i32) -> (i32, i32) {
    %c0_i32 = arith.constant 0 : i32
    %c0_i32_0 = arith.constant 0 : i32
    return %c0_i32, %arg0 : i32, i32
  }
}

</mosaic_0001>

<llo_original>
// kernel: tpu_custom_call.1
$region0: #{tpu_custom_call.1}
  #allocation0 [shape = 'u32[]', space=smem, size = 0x4, offset = 0x4, fixed_abs, tag = 'smem constant byte address 0x4 - core index']
  #allocation1 [shape = 'u32[144,128]{1,0:T(1,128)}', space=vmem, size = 0x12000, scoped, tag = 'internal scratch']
  %s0 = inlined_call_operand.hbm [shape: bf16[8,128], index: 0, kind: input, shape index: {}]
  %s1 = inlined_call_operand.hbm [shape: bf16[128,128], index: 1, kind: input, shape index: {}]
  %s2 = inlined_call_operand.vmem [shape: f32[1,128], index: 2, kind: input, shape index: {}]
  %s3 = inlined_call_operand.hbm [shape: bf16[128,512], index: 3, kind: input, shape index: {}]
  %s4 = inlined_call_operand.vmem [shape: f32[1,512], index: 4, kind: input, shape index: {}]
  %s5 = inlined_call_operand.hbm [shape: f32[8,512], index: 5, kind: output, shape index: {}]
  %s6 = sld [smem:[#allocation0]]
  $region42: #{tpu_custom_call.1} parent=0
    _
  %s8 = ssub.s32 1, %s6
  %s9 = scalar_select 0, %s8, %s6
  $region1: #{tpu_custom_call.1} parent=0
    #allocation2 [shape = 'u8[2048]{0}', space=vmem, size = 0x800, scoped, tag = 'input window, operand 0, single buffered']
    #allocation3 [shape = 's32[1]{0}', space=sflag, size = 0x4, scoped, tag = 'scoped memory for tpu_custom_call.1']
    #allocation4 [shape = 's32[1]{0}', space=sflag, size = 0x4, scoped, tag = 'scoped memory for tpu_custom_call.1']
    #allocation5 [shape = 'u8[32768]{0}', space=vmem, size = 0x8000, scoped, tag = 'input window, operand 1, single buffered']
    #allocation6 [shape = 's32[1]{0}', space=sflag, size = 0x4, scoped, tag = 'scoped memory for tpu_custom_call.1']
    #allocation7 [shape = 'u8[131072]{0}', space=vmem, size = 0x20000, scoped, tag = 'input window, operand 3, single buffered']
    #allocation8 [shape = 'u8[16384]{0}', space=vmem, size = 0x4000, scoped, tag = 'output window, operand 0, single buffered']
    %10 = vsyncpa [#allocation3], 0
    %11 = vsyncpa [#allocation6], 0
    %12 = vsyncpa [#allocation4], 0
    // Predicated region
    $region2: #{tpu_custom_call.1} parent=1 // pred_check
      _
    $region3: #{tpu_custom_call.1} parent=1 // pred_check_branch
      %14 = sbr.rel (0) target = $region5
    $region4: #{tpu_custom_call.1} parent=1 // pred_region
      %s16 = ssub.s32 64, 64
      %17 = vsyncadd [#allocation3], %s16
      %s19 = sshll.u32 [#allocation2], 4
      %s20 = int_to_ptr.vmem [resolvable:$true] %s19
      %22 = dma.hbm_to_vmem [thread:$0]  %s0, 64, %s20, [#allocation3]
    $region5: #{tpu_custom_call.1} parent=1 // pred_fallthru
      _
    // Predicated region
    $region6: #{tpu_custom_call.1} parent=1 // pred_check
      _
    $region7: #{tpu_custom_call.1} parent=1 // pred_check_branch
      %24 = sbr.rel (0) target = $region9
    $region8: #{tpu_custom_call.1} parent=1 // pred_region
      %s26 = ssub.s32 1024, 1024
      %27 = vsyncadd [#allocation6], %s26
      %s28 = sshll.u32 [#allocation5], 4
      %s29 = int_to_ptr.vmem [resolvable:$true] %s28
      %34 = dma.hbm_to_vmem [thread:$0]  %s1, 1024, %s29, [#allocation6], 64, 64, 4
    $region9: #{tpu_custom_call.1} parent=1 // pred_fallthru
      _
    // Predicated region
    $region10: #{tpu_custom_call.1} parent=1 // pred_check
      _
    $region11: #{tpu_custom_call.1} parent=1 // pred_check_branch
      %36 = sbr.rel (0) target = $region13
    $region12: #{tpu_custom_call.1} parent=1 // pred_region
      _
    $region13: #{tpu_custom_call.1} parent=1 // pred_fallthru
      _
    // Predicated region
    $region14: #{tpu_custom_call.1} parent=1 // pred_check
      _
    $region15: #{tpu_custom_call.1} parent=1 // pred_check_branch
      %38 = sbr.rel (0) target = $region17
    $region16: #{tpu_custom_call.1} parent=1 // pred_region
      %s40 = ssub.s32 4096, 4096
      %41 = vsyncadd [#allocation6], %s40
      %s42 = sshll.u32 [#allocation7], 4
      %s43 = int_to_ptr.vmem [resolvable:$true] %s42
      %48 = dma.hbm_to_vmem [thread:$0]  %s3, 4096, %s43, [#allocation6], 256, 256, 16
    $region17: #{tpu_custom_call.1} parent=1 // pred_fallthru
      _
    // Predicated region
    $region18: #{tpu_custom_call.1} parent=1 // pred_check
      _
    $region19: #{tpu_custom_call.1} parent=1 // pred_check_branch
      %50 = sbr.rel (0) target = $region21
    $region20: #{tpu_custom_call.1} parent=1 // pred_region
      _
    $region21: #{tpu_custom_call.1} parent=1 // pred_fallthru
      _
    // Predicated region
    $region22: #{tpu_custom_call.1} parent=1 // pred_check
      _
    $region23: #{tpu_custom_call.1} parent=1 // pred_check_branch
      %52 = sbr.rel (0) target = $region25
    $region24: #{tpu_custom_call.1} parent=1 // pred_region
      %53 = dma.done [#allocation3], 64
    $region25: #{tpu_custom_call.1} parent=1 // pred_fallthru
      _
    // Predicated region
    $region26: #{tpu_custom_call.1} parent=1 // pred_check
      _
    $region27: #{tpu_custom_call.1} parent=1 // pred_check_branch
      %55 = sbr.rel (0) target = $region29
    $region28: #{tpu_custom_call.1} parent=1 // pred_region
      %56 = dma.done [#allocation6], 1024
    $region29: #{tpu_custom_call.1} parent=1 // pred_fallthru
      _
    // Predicated region
    $region30: #{tpu_custom_call.1} parent=1 // pred_check
      _
    $region31: #{tpu_custom_call.1} parent=1 // pred_check_branch
      %58 = sbr.rel (0) target = $region33
    $region32: #{tpu_custom_call.1} parent=1 // pred_region
      %59 = dma.done [#allocation6], 4096
    $region33: #{tpu_custom_call.1} parent=1 // pred_fallthru
      _
    %v61 = vld [vmem:[#allocation2] sm:$0xf]
    %v62 = vld [vmem:[#allocation5] sm:$0xf]
    %v63 = vld [vmem:[#allocation5 + $0x4] sm:$0xf]
    %v64 = vld [vmem:[#allocation5 + $0x8] sm:$0xf]
    %v65 = vld [vmem:[#allocation5 + $0xc] sm:$0xf]
    %v66 = vld [vmem:[#allocation5 + $0x10] sm:$0xf]
    %v67 = vld [vmem:[#allocation5 + $0x14] sm:$0xf]
    %v68 = vld [vmem:[#allocation5 + $0x18] sm:$0xf]
    %v69 = vld [vmem:[#allocation5 + $0x1c] sm:$0xf]
    %v70 = vld [vmem:[#allocation5 + $0x20] sm:$0xf]
    %v71 = vld [vmem:[#allocation5 + $0x24] sm:$0xf]
    %v72 = vld [vmem:[#allocation5 + $0x28] sm:$0xf]
    %v73 = vld [vmem:[#allocation5 + $0x2c] sm:$0xf]
    %v74 = vld [vmem:[#allocation5 + $0x30] sm:$0xf]
    %v75 = vld [vmem:[#allocation5 + $0x34] sm:$0xf]
    %v76 = vld [vmem:[#allocation5 + $0x38] sm:$0xf]
    %v77 = vld [vmem:[#allocation5 + $0x3c] sm:$0xf]
    %v78 = vld [vmem:[%s2] sm:$0x1]
    %v80 = vlaneseq
    %v81 = vshrl.u32 %v80, 7
    %v82 = vsub.s32 0, %v81
    %v83 = vrot.slane %v78, %v82
    %v101 = vunpack.c.l.b16 %v62
    %v102 = vunpack.c.l.b16 %v63
    %v103 = vunpack.c.l.b16 %v64
    %v104 = vunpack.c.l.b16 %v65
    %v105 = vunpack.c.l.b16 %v66
    %v106 = vunpack.c.l.b16 %v67
    %v107 = vunpack.c.l.b16 %v68
    %v108 = vunpack.c.l.b16 %v69
    %v109 = vunpack.c.l.b16 %v70
    %v110 = vunpack.c.l.b16 %v71
    %v111 = vunpack.c.l.b16 %v72
    %v112 = vunpack.c.l.b16 %v73
    %v113 = vunpack.c.l.b16 %v74
    %v114 = vunpack.c.l.b16 %v75
    %v115 = vunpack.c.l.b16 %v76
    %v116 = vunpack.c.l.b16 %v77
    %v117 = vpack.c.b16 %v102, %v101
    %v118 = vpack.c.b16 %v104, %v103
    %v119 = vpack.c.b16 %v106, %v105
    %v120 = vpack.c.b16 %v108, %v107
    %v121 = vpack.c.b16 %v110, %v109
    %v122 = vpack.c.b16 %v112, %v111
    %v123 = vpack.c.b16 %v114, %v113
    %v124 = vpack.c.b16 %v116, %v115
    %133 = vmatprep.subr.bf16.mxu0 0
    %134 = vmatpush1.bf16.msra.mxu0 %v117
    %135 = vmatprep.subr.bf16.mxu0 0
    %136 = vmatpush1.bf16.msra.mxu0 %v118
    %137 = vmatprep.subr.bf16.mxu0 0
    %138 = vmatpush1.bf16.msra.mxu0 %v119
    %139 = vmatprep.subr.bf16.mxu0 0
    %140 = vmatpush1.bf16.msra.mxu0 %v120
    %141 = vmatprep.subr.bf16.mxu0 0
    %142 = vmatpush1.bf16.msra.mxu0 %v121
    %143 = vmatprep.subr.bf16.mxu0 0
    %144 = vmatpush1.bf16.msra.mxu0 %v122
    %145 = vmatprep.subr.bf16.mxu0 0
    %146 = vmatpush1.bf16.msra.mxu0 %v123
    %147 = vmatprep.subr.bf16.mxu0 0
    %148 = vmatpush1.bf16.msra.mxu0 %v124
    %149 = vmatprep.subr.bf16.mxu0 0
    %150 = vmatpush1.bf16.msra.mxu0 0
    %151 = vmatprep.subr.bf16.mxu0 0
    %152 = vmatpush1.bf16.msra.mxu0 0
    %153 = vmatprep.subr.bf16.mxu0 0
    %154 = vmatpush1.bf16.msra.mxu0 0
    %155 = vmatprep.subr.bf16.mxu0 0
    %156 = vmatpush1.bf16.msra.mxu0 0
    %157 = vmatprep.subr.bf16.mxu0 0
    %158 = vmatpush1.bf16.msra.mxu0 0
    %159 = vmatprep.subr.bf16.mxu0 0
    %160 = vmatpush1.bf16.msra.mxu0 0
    %161 = vmatprep.subr.bf16.mxu0 0
    %162 = vmatpush1.bf16.msra.mxu0 0
    %163 = vmatprep.subr.bf16.mxu0 0
    %164 = vmatpush1.bf16.msra.mxu0 0
    %165 = vmatprep.mubr.bf16.mxu0 0
    %166 = vmatmul.mubr.bf16.gmra.mrb[0].mxu0 %v61
    %v167 = vpop.f32.mrb[0].mxu0
    %v168 = vadd.f32 %v83, %v167
    %v169 = vpop.f32.mrb[0].mxu0
    %v170 = vpop.f32.mrb[0].mxu0
    %v171 = vpop.f32.mrb[0].mxu0
    %172 = vdwg.mxu0
    %vm173 = vcmp.ge.f32.partialorder %v168, 0.0
    %v174 = vmul.f32 %v168, 0.01
    %v175 = vsel %vm173, %v168, %v174
    %v176 = vpack.c.bf16 %v175, %v175
    %v177 = vld [vmem:[#allocation7] sm:$0xff]
    %v178 = vld [vmem:[#allocation7 + $0x8] sm:$0xff]
    %v179 = vld [vmem:[#allocation7 + $0x10] sm:$0xff]
    %v180 = vld [vmem:[#allocation7 + $0x18] sm:$0xff]
    %v181 = vld [vmem:[#allocation7 + $0x20] sm:$0xff]
    %v182 = vld [vmem:[#allocation7 + $0x28] sm:$0xff]
    %v183 = vld [vmem:[#allocation7 + $0x30] sm:$0xff]
    %v184 = vld [vmem:[#allocation7 + $0x38] sm:$0xff]
    %v185 = vld [vmem:[#allocation7 + $0x40] sm:$0xff]
    %v186 = vld [vmem:[#allocation7 + $0x48] sm:$0xff]
    %v187 = vld [vmem:[#allocation7 + $0x50] sm:$0xff]
    %v188 = vld [vmem:[#allocation7 + $0x58] sm:$0xff]
    %v189 = vld [vmem:[#allocation7 + $0x60] sm:$0xff]
    %v190 = vld [vmem:[#allocation7 + $0x68] sm:$0xff]
    %v191 = vld [vmem:[#allocation7 + $0x70] sm:$0xff]
    %v192 = vld [vmem:[#allocation7 + $0x78] sm:$0xff]
    %v193 = vld [vmem:[#allocation7 + $0x80] sm:$0xff]
    %v194 = vld [vmem:[#allocation7 + $0x88] sm:$0xff]
    %v195 = vld [vmem:[#allocation7 + $0x90] sm:$0xff]
    %v196 = vld [vmem:[#allocation7 + $0x98] sm:$0xff]
    %v197 = vld [vmem:[#allocation7 + $0xa0] sm:$0xff]
    %v198 = vld [vmem:[#allocation7 + $0xa8] sm:$0xff]
    %v199 = vld [vmem:[#allocation7 + $0xb0] sm:$0xff]
    %v200 = vld [vmem:[#allocation7 + $0xb8] sm:$0xff]
    %v201 = vld [vmem:[#allocation7 + $0xc0] sm:$0xff]
    %v202 = vld [vmem:[#allocation7 + $0xc8] sm:$0xff]
    %v203 = vld [vmem:[#allocation7 + $0xd0] sm:$0xff]
    %v204 = vld [vmem:[#allocation7 + $0xd8] sm:$0xff]
    %v205 = vld [vmem:[#allocation7 + $0xe0] sm:$0xff]
    %v206 = vld [vmem:[#allocation7 + $0xe8] sm:$0xff]
    %v207 = vld [vmem:[#allocation7 + $0xf0] sm:$0xff]
    %v208 = vld [vmem:[#allocation7 + $0xf8] sm:$0xff]
    %v209 = vld [vmem:[%s4] sm:$0xf]
    %v211 = vlaneseq
    %v212 = vshrl.u32 %v211, 7
    %v213 = vsub.s32 0, %v212
    %v214 = vrot.slane %v209, %v213
    %v215 = vlaneseq
    %v216 = vshrl.u32 %v215, 7
    %v217 = vsub.s32 1, %v216
    %v218 = vrot.slane %v209, %v217
    %v219 = vlaneseq
    %v220 = vshrl.u32 %v219, 7
    %v221 = vsub.s32 2, %v220
    %v222 = vrot.slane %v209, %v221
    %v223 = vlaneseq
    %v224 = vshrl.u32 %v223, 7
    %v225 = vsub.s32 3, %v224
    %v226 = vrot.slane %v209, %v225
    %v263 = vunpack.c.l.b16 %v177
    %v264 = vunpack.c.h.b16 %v177
    %v265 = vunpack.c.l.b16 %v178
    %v266 = vunpack.c.h.b16 %v178
    %v267 = vunpack.c.l.b16 %v179
    %v268 = vunpack.c.h.b16 %v179
    %v269 = vunpack.c.l.b16 %v180
    %v270 = vunpack.c.h.b16 %v180
    %v271 = vunpack.c.l.b16 %v181
    %v272 = vunpack.c.h.b16 %v181
    %v273 = vunpack.c.l.b16 %v182
    %v274 = vunpack.c.h.b16 %v182
    %v275 = vunpack.c.l.b16 %v183
    %v276 = vunpack.c.h.b16 %v183
    %v277 = vunpack.c.l.b16 %v184
    %v278 = vunpack.c.h.b16 %v184
    %v279 = vunpack.c.l.b16 %v185
    %v280 = vunpack.c.h.b16 %v185
    %v281 = vunpack.c.l.b16 %v186
    %v282 = vunpack.c.h.b16 %v186
    %v283 = vunpack.c.l.b16 %v187
    %v284 = vunpack.c.h.b16 %v187
    %v285 = vunpack.c.l.b16 %v188
    %v286 = vunpack.c.h.b16 %v188
    %v287 = vunpack.c.l.b16 %v189
    %v288 = vunpack.c.h.b16 %v189
    %v289 = vunpack.c.l.b16 %v190
    %v290 = vunpack.c.h.b16 %v190
    %v291 = vunpack.c.l.b16 %v191
    %v292 = vunpack.c.h.b16 %v191
    %v293 = vunpack.c.l.b16 %v192
    %v294 = vunpack.c.h.b16 %v192
    %v295 = vunpack.c.l.b16 %v193
    %v296 = vunpack.c.h.b16 %v193
    %v297 = vunpack.c.l.b16 %v194
    %v298 = vunpack.c.h.b16 %v194
    %v299 = vunpack.c.l.b16 %v195
    %v300 = vunpack.c.h.b16 %v195
    %v301 = vunpack.c.l.b16 %v196
    %v302 = vunpack.c.h.b16 %v196
    %v303 = vunpack.c.l.b16 %v197
    %v304 = vunpack.c.h.b16 %v197
    %v305 = vunpack.c.l.b16 %v198
    %v306 = vunpack.c.h.b16 %v198
    %v307 = vunpack.c.l.b16 %v199
    %v308 = vunpack.c.h.b16 %v199
    %v309 = vunpack.c.l.b16 %v200
    %v310 = vunpack.c.h.b16 %v200
    %v311 = vunpack.c.l.b16 %v201
    %v312 = vunpack.c.h.b16 %v201
    %v313 = vunpack.c.l.b16 %v202
    %v314 = vunpack.c.h.b16 %v202
    %v315 = vunpack.c.l.b16 %v203
    %v316 = vunpack.c.h.b16 %v203
    %v317 = vunpack.c.l.b16 %v204
    %v318 = vunpack.c.h.b16 %v204
    %v319 = vunpack.c.l.b16 %v205
    %v320 = vunpack.c.h.b16 %v205
    %v321 = vunpack.c.l.b16 %v206
    %v322 = vunpack.c.h.b16 %v206
    %v323 = vunpack.c.l.b16 %v207
    %v324 = vunpack.c.h.b16 %v207
    %v325 = vunpack.c.l.b16 %v208
    %v326 = vunpack.c.h.b16 %v208
    %v327 = vpack.c.b16 %v267, %v263
    %v328 = vpack.c.b16 %v268, %v264
    %v329 = vpack.c.b16 %v269, %v265
    %v330 = vpack.c.b16 %v270, %v266
    %v331 = vpack.c.b16 %v275, %v271
    %v332 = vpack.c.b16 %v276, %v272
    %v333 = vpack.c.b16 %v277, %v273
    %v334 = vpack.c.b16 %v278, %v274
    %v335 = vpack.c.b16 %v283, %v279
    %v336 = vpack.c.b16 %v284, %v280
    %v337 = vpack.c.b16 %v285, %v281
    %v338 = vpack.c.b16 %v286, %v282
    %v339 = vpack.c.b16 %v291, %v287
    %v340 = vpack.c.b16 %v292, %v288
    %v341 = vpack.c.b16 %v293, %v289
    %v342 = vpack.c.b16 %v294, %v290
    %v343 = vpack.c.b16 %v299, %v295
    %v344 = vpack.c.b16 %v300, %v296
    %v345 = vpack.c.b16 %v301, %v297
    %v346 = vpack.c.b16 %v302, %v298
    %v347 = vpack.c.b16 %v307, %v303
    %v348 = vpack.c.b16 %v308, %v304
    %v349 = vpack.c.b16 %v309, %v305
    %v350 = vpack.c.b16 %v310, %v306
    %v351 = vpack.c.b16 %v315, %v311
    %v352 = vpack.c.b16 %v316, %v312
    %v353 = vpack.c.b16 %v317, %v313
    %v354 = vpack.c.b16 %v318, %v314
    %v355 = vpack.c.b16 %v323, %v319
    %v356 = vpack.c.b16 %v324, %v320
    %v357 = vpack.c.b16 %v325, %v321
    %v358 = vpack.c.b16 %v326, %v322
    %391 = vmatprep.subr.bf16.mxu0 %v328
    %392 = vmatpush1.bf16.msra.mxu0 %v327
    %393 = vmatprep.subr.bf16.mxu0 %v332
    %394 = vmatpush1.bf16.msra.mxu0 %v331
    %395 = vmatprep.subr.bf16.mxu0 %v336
    %396 = vmatpush1.bf16.msra.mxu0 %v335
    %397 = vmatprep.subr.bf16.mxu0 %v340
    %398 = vmatpush1.bf16.msra.mxu0 %v339
    %399 = vmatprep.subr.bf16.mxu0 %v344
    %400 = vmatpush1.bf16.msra.mxu0 %v343
    %401 = vmatprep.subr.bf16.mxu0 %v348
    %402 = vmatpush1.bf16.msra.mxu0 %v347
    %403 = vmatprep.subr.bf16.mxu0 %v352
    %404 = vmatpush1.bf16.msra.mxu0 %v351
    %405 = vmatprep.subr.bf16.mxu0 %v356
    %406 = vmatpush1.bf16.msra.mxu0 %v355
    %407 = vmatprep.subr.bf16.mxu0 0
    %408 = vmatpush1.bf16.msra.mxu0 0
    %409 = vmatprep.subr.bf16.mxu0 0
    %410 = vmatpush1.bf16.msra.mxu0 0
    %411 = vmatprep.subr.bf16.mxu0 0
    %412 = vmatpush1.bf16.msra.mxu0 0
    %413 = vmatprep.subr.bf16.mxu0 0
    %414 = vmatpush1.bf16.msra.mxu0 0
    %415 = vmatprep.subr.bf16.mxu0 0
    %416 = vmatpush1.bf16.msra.mxu0 0
    %417 = vmatprep.subr.bf16.mxu0 0
    %418 = vmatpush1.bf16.msra.mxu0 0
    %419 = vmatprep.subr.bf16.mxu0 0
    %420 = vmatpush1.bf16.msra.mxu0 0
    %421 = vmatprep.subr.bf16.mxu0 0
    %422 = vmatpush1.bf16.msra.mxu0 0
    %423 = vmatprep.mubr.bf16.mxu0 0
    %424 = vmatmul.mubr.bf16.gmra.mrb[0].mxu0 %v176
    %v425 = vpop.f32.mrb[0].mxu0
    %v426 = vadd.f32 %v214, %v425
    %v427 = vpop.f32.mrb[0].mxu0
    %v428 = vadd.f32 %v218, %v427
    %v429 = vpop.f32.mrb[0].mxu0
    %v430 = vpop.f32.mrb[0].mxu0
    %431 = vdwg.mxu0
    %432 = vmatprep.subr.bf16.mxu0 %v330
    %433 = vmatpush1.bf16.msra.mxu0 %v329
    %434 = vmatprep.subr.bf16.mxu0 %v334
    %435 = vmatpush1.bf16.msra.mxu0 %v333
    %436 = vmatprep.subr.bf16.mxu0 %v338
    %437 = vmatpush1.bf16.msra.mxu0 %v337
    %438 = vmatprep.subr.bf16.mxu0 %v342
    %439 = vmatpush1.bf16.msra.mxu0 %v341
    %440 = vmatprep.subr.bf16.mxu0 %v346
    %441 = vmatpush1.bf16.msra.mxu0 %v345
    %442 = vmatprep.subr.bf16.mxu0 %v350
    %443 = vmatpush1.bf16.msra.mxu0 %v349
    %444 = vmatprep.subr.bf16.mxu0 %v354
    %445 = vmatpush1.bf16.msra.mxu0 %v353
    %446 = vmatprep.subr.bf16.mxu0 %v358
    %447 = vmatpush1.bf16.msra.mxu0 %v357
    %448 = vmatprep.subr.bf16.mxu0 0
    %449 = vmatpush1.bf16.msra.mxu0 0
    %450 = vmatprep.subr.bf16.mxu0 0
    %451 = vmatpush1.bf16.msra.mxu0 0
    %452 = vmatprep.subr.bf16.mxu0 0
    %453 = vmatpush1.bf16.msra.mxu0 0
    %454 = vmatprep.subr.bf16.mxu0 0
    %455 = vmatpush1.bf16.msra.mxu0 0
    %456 = vmatprep.subr.bf16.mxu0 0
    %457 = vmatpush1.bf16.msra.mxu0 0
    %458 = vmatprep.subr.bf16.mxu0 0
    %459 = vmatpush1.bf16.msra.mxu0 0
    %460 = vmatprep.subr.bf16.mxu0 0
    %461 = vmatpush1.bf16.msra.mxu0 0
    %462 = vmatprep.subr.bf16.mxu0 0
    %463 = vmatpush1.bf16.msra.mxu0 0
    %464 = vmatprep.mubr.bf16.mxu0 0
    %465 = vmatmul.mubr.bf16.gmra.mrb[0].mxu0 %v176
    %v466 = vpop.f32.mrb[0].mxu0
    %v467 = vadd.f32 %v222, %v466
    %v468 = vpop.f32.mrb[0].mxu0
    %v469 = vadd.f32 %v226, %v468
    %v470 = vpop.f32.mrb[0].mxu0
    %v471 = vpop.f32.mrb[0].mxu0
    %472 = vdwg.mxu0
    %473 = vst [vmem:[#allocation8] sm:$0xff] %v426
    %474 = vst [vmem:[#allocation8 + $0x8] sm:$0xff] %v428
    %475 = vst [vmem:[#allocation8 + $0x10] sm:$0xff] %v467
    %476 = vst [vmem:[#allocation8 + $0x18] sm:$0xff] %v469
    // Predicated region
    $region34: #{tpu_custom_call.1} parent=1 // pred_check
      _
    $region35: #{tpu_custom_call.1} parent=1 // pred_check_branch
      %478 = sbr.rel (0) target = $region37
    $region36: #{tpu_custom_call.1} parent=1 // pred_region
      %s480 = ssub.s32 512, 512
      %481 = vsyncadd [#allocation4], %s480
      %s483 = sshll.u32 [#allocation8], 4
      %s484 = int_to_ptr.vmem [resolvable:$true] %s483
      %486 = dma.vmem_to_hbm [thread:$0]  %s484, 512, %s5, [#allocation4]
    $region37: #{tpu_custom_call.1} parent=1 // pred_fallthru
      _
    // Predicated region
    $region38: #{tpu_custom_call.1} parent=1 // pred_check
      _
    $region39: #{tpu_custom_call.1} parent=1 // pred_check_branch
      %488 = sbr.rel (0) target = $region41
    $region40: #{tpu_custom_call.1} parent=1 // pred_region
      %489 = dma.done [#allocation4], 512
    $region41: #{tpu_custom_call.1} parent=1 // pred_fallthru
      _
    %490 = vsyncpa [#allocation3], 1
    %491 = vsyncpa [#allocation6], 1
    %492 = vsyncpa [#allocation4], 1

// kernel: tpu_custom_call.1
$region0: #{tpu_custom_call.1}
  #allocation0 [shape = 'u32[]', space=smem, size = 0x4, offset = 0x4, fixed_abs, tag = 'smem constant byte address 0x4 - core index']
  #allocation1 [shape = 'u32[144,128]{1,0:T(1,128)}', space=vmem, size = 0x12000, scoped, tag = 'internal scratch']
  %s0 = inlined_call_operand.hbm [shape: bf16[8,128], index: 0, kind: input, shape index: {}]
  %s1 = inlined_call_operand.hbm [shape: bf16[128,128], index: 1, kind: input, shape index: {}]
  %s2 = inlined_call_operand.vmem [shape: f32[1,128], index: 2, kind: input, shape index: {}]
  %s3 = inlined_call_operand.hbm [shape: bf16[128,512], index: 3, kind: input, shape index: {}]
  %s4 = inlined_call_operand.vmem [shape: f32[1,512], index: 4, kind: input, shape index: {}]
  %s5 = inlined_call_operand.hbm [shape: f32[8,512], index: 5, kind: output, shape index: {}]
  %s6 = sld [smem:[#allocation0]]
  $region42: #{tpu_custom_call.1} parent=0
    _
  %s8 = ssub.s32 1, %s6
  %s9 = scalar_select 0, %s8, %s6
  $region1: #{tpu_custom_call.1} parent=0
    #allocation2 [shape = 'u8[2048]{0}', space=vmem, size = 0x800, scoped, tag = 'input window, operand 0, single buffered']
    #allocation3 [shape = 's32[1]{0}', space=sflag, size = 0x4, scoped, tag = 'scoped memory for tpu_custom_call.1']
    #allocation4 [shape = 's32[1]{0}', space=sflag, size = 0x4, scoped, tag = 'scoped memory for tpu_custom_call.1']
    #allocation5 [shape = 'u8[32768]{0}', space=vmem, size = 0x8000, scoped, tag = 'input window, operand 1, single buffered']
    #allocation6 [shape = 's32[1]{0}', space=sflag, size = 0x4, scoped, tag = 'scoped memory for tpu_custom_call.1']
    #allocation7 [shape = 'u8[131072]{0}', space=vmem, size = 0x20000, scoped, tag = 'input window, operand 3, single buffered']
    #allocation8 [shape = 'u8[16384]{0}', space=vmem, size = 0x4000, scoped, tag = 'output window, operand 0, single buffered']
    %10 = vsyncpa [#allocation3], 0
    %11 = vsyncpa [#allocation6], 0
    %12 = vsyncpa [#allocation4], 0
    // Predicated region
    $region2: #{tpu_custom_call.1} parent=1 // pred_check
      _
    $region3: #{tpu_custom_call.1} parent=1 // pred_check_branch
      %14 = sbr.rel (0) target = $region5
    $region4: #{tpu_custom_call.1} parent=1 // pred_region
      %s16 = ssub.s32 64, 64
      %17 = vsyncadd [#allocation3], %s16
      %s19 = sshll.u32 [#allocation2], 4
      %s20 = int_to_ptr.vmem [resolvable:$true] %s19
      %22 = dma.hbm_to_vmem [thread:$0]  %s0, 64, %s20, [#allocation3]
    $region5: #{tpu_custom_call.1} parent=1 // pred_fallthru
      _
    // Predicated region
    $region6: #{tpu_custom_call.1} parent=1 // pred_check
      _
    $region7: #{tpu_custom_call.1} parent=1 // pred_check_branch
      %24 = sbr.rel (0) target = $region9
    $region8: #{tpu_custom_call.1} parent=1 // pred_region
      %s26 = ssub.s32 1024, 1024
      %27 = vsyncadd [#allocation6], %s26
      %s28 = sshll.u32 [#allocation5], 4
      %s29 = int_to_ptr.vmem [resolvable:$true] %s28
      %34 = dma.hbm_to_vmem [thread:$0]  %s1, 1024, %s29, [#allocation6], 64, 64, 4
    $region9: #{tpu_custom_call.1} parent=1 // pred_fallthru
      _
    // Predicated region
    $region10: #{tpu_custom_call.1} parent=1 // pred_check
      _
    $region11: #{tpu_custom_call.1} parent=1 // pred_check_branch
      %36 = sbr.rel (0) target = $region13
    $region12: #{tpu_custom_call.1} parent=1 // pred_region
      _
    $region13: #{tpu_custom_call.1} parent=1 // pred_fallthru
      _
    // Predicated region
    $region14: #{tpu_custom_call.1} parent=1 // pred_check
      _
    $region15: #{tpu_custom_call.1} parent=1 // pred_check_branch
      %38 = sbr.rel (0) target = $region17
    $region16: #{tpu_custom_call.1} parent=1 // pred_region
      %s40 = ssub.s32 4096, 4096
      %41 = vsyncadd [#allocation6], %s40
      %s42 = sshll.u32 [#allocation7], 4
      %s43 = int_to_ptr.vmem [resolvable:$true] %s42
      %48 = dma.hbm_to_vmem [thread:$0]  %s3, 4096, %s43, [#allocation6], 256, 256, 16
    $region17: #{tpu_custom_call.1} parent=1 // pred_fallthru
      _
    // Predicated region
    $region18: #{tpu_custom_call.1} parent=1 // pred_check
      _
    $region19: #{tpu_custom_call.1} parent=1 // pred_check_branch
      %50 = sbr.rel (0) target = $region21
    $region20: #{tpu_custom_call.1} parent=1 // pred_region
      _
    $region21: #{tpu_custom_call.1} parent=1 // pred_fallthru
      _
    // Predicated region
    $region22: #{tpu_custom_call.1} parent=1 // pred_check
      _
    $region23: #{tpu_custom_call.1} parent=1 // pred_check_branch
      %52 = sbr.rel (0) target = $region25
    $region24: #{tpu_custom_call.1} parent=1 // pred_region
      %53 = dma.done [#allocation3], 64
    $region25: #{tpu_custom_call.1} parent=1 // pred_fallthru
      _
    // Predicated region
    $region26: #{tpu_custom_call.1} parent=1 // pred_check
      _
    $region27: #{tpu_custom_call.1} parent=1 // pred_check_branch
      %55 = sbr.rel (0) target = $region29
    $region28: #{tpu_custom_call.1} parent=1 // pred_region
      %56 = dma.done [#allocation6], 1024
    $region29: #{tpu_custom_call.1} parent=1 // pred_fallthru
      _
    // Predicated region
    $region30: #{tpu_custom_call.1} parent=1 // pred_check
      _
    $region31: #{tpu_custom_call.1} parent=1 // pred_check_branch
      %58 = sbr.rel (0) target = $region33
    $region32: #{tpu_custom_call.1} parent=1 // pred_region
      %59 = dma.done [#allocation6], 4096
    $region33: #{tpu_custom_call.1} parent=1 // pred_fallthru
      _
    %v61 = vld [vmem:[#allocation2] sm:$0xf]
    %v62 = vld [vmem:[#allocation5] sm:$0xf]
    %v63 = vld [vmem:[#allocation5 + $0x4] sm:$0xf]
    %v64 = vld [vmem:[#allocation5 + $0x8] sm:$0xf]
    %v65 = vld [vmem:[#allocation5 + $0xc] sm:$0xf]
    %v66 = vld [vmem:[#allocation5 + $0x10] sm:$0xf]
    %v67 = vld [vmem:[#allocation5 + $0x14] sm:$0xf]
    %v68 = vld [vmem:[#allocation5 + $0x18] sm:$0xf]
    %v69 = vld [vmem:[#allocation5 + $0x1c] sm:$0xf]
    %v70 = vld [vmem:[#allocation5 + $0x20] sm:$0xf]
    %v71 = vld [vmem:[#allocation5 + $0x24] sm:$0xf]
    %v72 = vld [vmem:[#allocation5 + $0x28] sm:$0xf]
    %v73 = vld [vmem:[#allocation5 + $0x2c] sm:$0xf]
    %v74 = vld [vmem:[#allocation5 + $0x30] sm:$0xf]
    %v75 = vld [vmem:[#allocation5 + $0x34] sm:$0xf]
    %v76 = vld [vmem:[#allocation5 + $0x38] sm:$0xf]
    %v77 = vld [vmem:[#allocation5 + $0x3c] sm:$0xf]
    %v78 = vld [vmem:[%s2] sm:$0x1]
    %v80 = vlaneseq
    %v81 = vshrl.u32 %v80, 7
    %v82 = vsub.s32 0, %v81
    %v83 = vrot.slane %v78, %v82
    %v101 = vunpack.c.l.b16 %v62
    %v102 = vunpack.c.l.b16 %v63
    %v103 = vunpack.c.l.b16 %v64
    %v104 = vunpack.c.l.b16 %v65
    %v105 = vunpack.c.l.b16 %v66
    %v106 = vunpack.c.l.b16 %v67
    %v107 = vunpack.c.l.b16 %v68
    %v108 = vunpack.c.l.b16 %v69
    %v109 = vunpack.c.l.b16 %v70
    %v110 = vunpack.c.l.b16 %v71
    %v111 = vunpack.c.l.b16 %v72
    %v112 = vunpack.c.l.b16 %v73
    %v113 = vunpack.c.l.b16 %v74
    %v114 = vunpack.c.l.b16 %v75
    %v115 = vunpack.c.l.b16 %v76
    %v116 = vunpack.c.l.b16 %v77
    %v117 = vpack.c.b16 %v102, %v101
    %v118 = vpack.c.b16 %v104, %v103
    %v119 = vpack.c.b16 %v106, %v105
    %v120 = vpack.c.b16 %v108, %v107
    %v121 = vpack.c.b16 %v110, %v109
    %v122 = vpack.c.b16 %v112, %v111
    %v123 = vpack.c.b16 %v114, %v113
    %v124 = vpack.c.b16 %v116, %v115
    %133 = vmatprep.subr.bf16.mxu0 0
    %134 = vmatpush1.bf16.msra.mxu0 %v117
    %135 = vmatprep.subr.bf16.mxu0 0
    %136 = vmatpush1.bf16.msra.mxu0 %v118
    %137 = vmatprep.subr.bf16.mxu0 0
    %138 = vmatpush1.bf16.msra.mxu0 %v119
    %139 = vmatprep.subr.bf16.mxu0 0
    %140 = vmatpush1.bf16.msra.mxu0 %v120
    %141 = vmatprep.subr.bf16.mxu0 0
    %142 = vmatpush1.bf16.msra.mxu0 %v121
    %143 = vmatprep.subr.bf16.mxu0 0
    %144 = vmatpush1.bf16.msra.mxu0 %v122
    %145 = vmatprep.subr.bf16.mxu0 0
    %146 = vmatpush1.bf16.msra.mxu0 %v123
    %147 = vmatprep.subr.bf16.mxu0 0
    %148 = vmatpush1.bf16.msra.mxu0 %v124
    %149 = vmatprep.subr.bf16.mxu0 0
    %150 = vmatpush1.bf16.msra.mxu0 0
    %151 = vmatprep.subr.bf16.mxu0 0
    %152 = vmatpush1.bf16.msra.mxu0 0
    %153 = vmatprep.subr.bf16.mxu0 0
    %154 = vmatpush1.bf16.msra.mxu0 0
    %155 = vmatprep.subr.bf16.mxu0 0
    %156 = vmatpush1.bf16.msra.mxu0 0
    %157 = vmatprep.subr.bf16.mxu0 0
    %158 = vmatpush1.bf16.msra.mxu0 0
    %159 = vmatprep.subr.bf16.mxu0 0
    %160 = vmatpush1.bf16.msra.mxu0 0
    %161 = vmatprep.subr.bf16.mxu0 0
    %162 = vmatpush1.bf16.msra.mxu0 0
    %163 = vmatprep.subr.bf16.mxu0 0
    %164 = vmatpush1.bf16.msra.mxu0 0
    %165 = vmatprep.mubr.bf16.mxu0 0
    %166 = vmatmul.mubr.bf16.gmra.mrb[0].mxu0 %v61
    %v167 = vpop.f32.mrb[0].mxu0
    %v168 = vadd.f32 %v83, %v167
    %v169 = vpop.f32.mrb[0].mxu0
    %v170 = vpop.f32.mrb[0].mxu0
    %v171 = vpop.f32.mrb[0].mxu0
    %172 = vdwg.mxu0
    %vm173 = vcmp.ge.f32.partialorder %v168, 0.0
    %v174 = vmul.f32 %v168, 0.01
    %v175 = vsel %vm173, %v168, %v174
    %v176 = vpack.c.bf16 %v175, %v175
    %v177 = vld [vmem:[#allocation7] sm:$0xff]
    %v178 = vld [vmem:[#allocation7 + $0x8] sm:$0xff]
    %v179 = vld [vmem:[#allocation7 + $0x10] sm:$0xff]
    %v180 = vld [vmem:[#allocation7 + $0x18] sm:$0xff]
    %v181 = vld [vmem:[#allocation7 + $0x20] sm:$0xff]
    %v182 = vld [vmem:[#allocation7 + $0x28] sm:$0xff]
    %v183 = vld [vmem:[#allocation7 + $0x30] sm:$0xff]
    %v184 = vld [vmem:[#allocation7 + $0x38] sm:$0xff]
    %v185 = vld [vmem:[#allocation7 + $0x40] sm:$0xff]
    %v186 = vld [vmem:[#allocation7 + $0x48] sm:$0xff]
    %v187 = vld [vmem:[#allocation7 + $0x50] sm:$0xff]
    %v188 = vld [vmem:[#allocation7 + $0x58] sm:$0xff]
    %v189 = vld [vmem:[#allocation7 + $0x60] sm:$0xff]
    %v190 = vld [vmem:[#allocation7 + $0x68] sm:$0xff]
    %v191 = vld [vmem:[#allocation7 + $0x70] sm:$0xff]
    %v192 = vld [vmem:[#allocation7 + $0x78] sm:$0xff]
    %v193 = vld [vmem:[#allocation7 + $0x80] sm:$0xff]
    %v194 = vld [vmem:[#allocation7 + $0x88] sm:$0xff]
    %v195 = vld [vmem:[#allocation7 + $0x90] sm:$0xff]
    %v196 = vld [vmem:[#allocation7 + $0x98] sm:$0xff]
    %v197 = vld [vmem:[#allocation7 + $0xa0] sm:$0xff]
    %v198 = vld [vmem:[#allocation7 + $0xa8] sm:$0xff]
    %v199 = vld [vmem:[#allocation7 + $0xb0] sm:$0xff]
    %v200 = vld [vmem:[#allocation7 + $0xb8] sm:$0xff]
    %v201 = vld [vmem:[#allocation7 + $0xc0] sm:$0xff]
    %v202 = vld [vmem:[#allocation7 + $0xc8] sm:$0xff]
    %v203 = vld [vmem:[#allocation7 + $0xd0] sm:$0xff]
    %v204 = vld [vmem:[#allocation7 + $0xd8] sm:$0xff]
    %v205 = vld [vmem:[#allocation7 + $0xe0] sm:$0xff]
    %v206 = vld [vmem:[#allocation7 + $0xe8] sm:$0xff]
    %v207 = vld [vmem:[#allocation7 + $0xf0] sm:$0xff]
    %v208 = vld [vmem:[#allocation7 + $0xf8] sm:$0xff]
    %v209 = vld [vmem:[%s4] sm:$0xf]
    %v211 = vlaneseq
    %v212 = vshrl.u32 %v211, 7
    %v213 = vsub.s32 0, %v212
    %v214 = vrot.slane %v209, %v213
    %v215 = vlaneseq
    %v216 = vshrl.u32 %v215, 7
    %v217 = vsub.s32 1, %v216
    %v218 = vrot.slane %v209, %v217
    %v219 = vlaneseq
    %v220 = vshrl.u32 %v219, 7
    %v221 = vsub.s32 2, %v220
    %v222 = vrot.slane %v209, %v221
    %v223 = vlaneseq
    %v224 = vshrl.u32 %v223, 7
    %v225 = vsub.s32 3, %v224
    %v226 = vrot.slane %v209, %v225
    %v263 = vunpack.c.l.b16 %v177
    %v264 = vunpack.c.h.b16 %v177
    %v265 = vunpack.c.l.b16 %v178
    %v266 = vunpack.c.h.b16 %v178
    %v267 = vunpack.c.l.b16 %v179
    %v268 = vunpack.c.h.b16 %v179
    %v269 = vunpack.c.l.b16 %v180
    %v270 = vunpack.c.h.b16 %v180
    %v271 = vunpack.c.l.b16 %v181
    %v272 = vunpack.c.h.b16 %v181
    %v273 = vunpack.c.l.b16 %v182
    %v274 = vunpack.c.h.b16 %v182
    %v275 = vunpack.c.l.b16 %v183
    %v276 = vunpack.c.h.b16 %v183
    %v277 = vunpack.c.l.b16 %v184
    %v278 = vunpack.c.h.b16 %v184
    %v279 = vunpack.c.l.b16 %v185
    %v280 = vunpack.c.h.b16 %v185
    %v281 = vunpack.c.l.b16 %v186
    %v282 = vunpack.c.h.b16 %v186
    %v283 = vunpack.c.l.b16 %v187
    %v284 = vunpack.c.h.b16 %v187
    %v285 = vunpack.c.l.b16 %v188
    %v286 = vunpack.c.h.b16 %v188
    %v287 = vunpack.c.l.b16 %v189
    %v288 = vunpack.c.h.b16 %v189
    %v289 = vunpack.c.l.b16 %v190
    %v290 = vunpack.c.h.b16 %v190
    %v291 = vunpack.c.l.b16 %v191
    %v292 = vunpack.c.h.b16 %v191
    %v293 = vunpack.c.l.b16 %v192
    %v294 = vunpack.c.h.b16 %v192
    %v295 = vunpack.c.l.b16 %v193
    %v296 = vunpack.c.h.b16 %v193
    %v297 = vunpack.c.l.b16 %v194
    %v298 = vunpack.c.h.b16 %v194
    %v299 = vunpack.c.l.b16 %v195
    %v300 = vunpack.c.h.b16 %v195
    %v301 = vunpack.c.l.b16 %v196
    %v302 = vunpack.c.h.b16 %v196
    %v303 = vunpack.c.l.b16 %v197
    %v304 = vunpack.c.h.b16 %v197
    %v305 = vunpack.c.l.b16 %v198
    %v306 = vunpack.c.h.b16 %v198
    %v307 = vunpack.c.l.b16 %v199
    %v308 = vunpack.c.h.b16 %v199
    %v309 = vunpack.c.l.b16 %v200
    %v310 = vunpack.c.h.b16 %v200
    %v311 = vunpack.c.l.b16 %v201
    %v312 = vunpack.c.h.b16 %v201
    %v313 = vunpack.c.l.b16 %v202
    %v314 = vunpack.c.h.b16 %v202
    %v315 = vunpack.c.l.b16 %v203
    %v316 = vunpack.c.h.b16 %v203
    %v317 = vunpack.c.l.b16 %v204
    %v318 = vunpack.c.h.b16 %v204
    %v319 = vunpack.c.l.b16 %v205
    %v320 = vunpack.c.h.b16 %v205
    %v321 = vunpack.c.l.b16 %v206
    %v322 = vunpack.c.h.b16 %v206
    %v323 = vunpack.c.l.b16 %v207
    %v324 = vunpack.c.h.b16 %v207
    %v325 = vunpack.c.l.b16 %v208
    %v326 = vunpack.c.h.b16 %v208
    %v327 = vpack.c.b16 %v267, %v263
    %v328 = vpack.c.b16 %v268, %v264
    %v329 = vpack.c.b16 %v269, %v265
    %v330 = vpack.c.b16 %v270, %v266
    %v331 = vpack.c.b16 %v275, %v271
    %v332 = vpack.c.b16 %v276, %v272
    %v333 = vpack.c.b16 %v277, %v273
    %v334 = vpack.c.b16 %v278, %v274
    %v335 = vpack.c.b16 %v283, %v279
    %v336 = vpack.c.b16 %v284, %v280
    %v337 = vpack.c.b16 %v285, %v281
    %v338 = vpack.c.b16 %v286, %v282
    %v339 = vpack.c.b16 %v291, %v287
    %v340 = vpack.c.b16 %v292, %v288
    %v341 = vpack.c.b16 %v293, %v289
    %v342 = vpack.c.b16 %v294, %v290
    %v343 = vpack.c.b16 %v299, %v295
    %v344 = vpack.c.b16 %v300, %v296
    %v345 = vpack.c.b16 %v301, %v297
    %v346 = vpack.c.b16 %v302, %v298
    %v347 = vpack.c.b16 %v307, %v303
    %v348 = vpack.c.b16 %v308, %v304
    %v349 = vpack.c.b16 %v309, %v305
    %v350 = vpack.c.b16 %v310, %v306
    %v351 = vpack.c.b16 %v315, %v311
    %v352 = vpack.c.b16 %v316, %v312
    %v353 = vpack.c.b16 %v317, %v313
    %v354 = vpack.c.b16 %v318, %v314
    %v355 = vpack.c.b16 %v323, %v319
    %v356 = vpack.c.b16 %v324, %v320
    %v357 = vpack.c.b16 %v325, %v321
    %v358 = vpack.c.b16 %v326, %v322
    %391 = vmatprep.subr.bf16.mxu0 %v328
    %392 = vmatpush1.bf16.msra.mxu0 %v327
    %393 = vmatprep.subr.bf16.mxu0 %v332
    %394 = vmatpush1.bf16.msra.mxu0 %v331
    %395 = vmatprep.subr.bf16.mxu0 %v336
    %396 = vmatpush1.bf16.msra.mxu0 %v335
    %397 = vmatprep.subr.bf16.mxu0 %v340
    %398 = vmatpush1.bf16.msra.mxu0 %v339
    %399 = vmatprep.subr.bf16.mxu0 %v344
    %400 = vmatpush1.bf16.msra.mxu0 %v343
    %401 = vmatprep.subr.bf16.mxu0 %v348
    %402 = vmatpush1.bf16.msra.mxu0 %v347
    %403 = vmatprep.subr.bf16.mxu0 %v352
    %404 = vmatpush1.bf16.msra.mxu0 %v351
    %405 = vmatprep.subr.bf16.mxu0 %v356
    %406 = vmatpush1.bf16.msra.mxu0 %v355
    %407 = vmatprep.subr.bf16.mxu0 0
    %408 = vmatpush1.bf16.msra.mxu0 0
    %409 = vmatprep.subr.bf16.mxu0 0
    %410 = vmatpush1.bf16.msra.mxu0 0
    %411 = vmatprep.subr.bf16.mxu0 0
    %412 = vmatpush1.bf16.msra.mxu0 0
    %413 = vmatprep.subr.bf16.mxu0 0
    %414 = vmatpush1.bf16.msra.mxu0 0
    %415 = vmatprep.subr.bf16.mxu0 0
    %416 = vmatpush1.bf16.msra.mxu0 0
    %417 = vmatprep.subr.bf16.mxu0 0
    %418 = vmatpush1.bf16.msra.mxu0 0
    %419 = vmatprep.subr.bf16.mxu0 0
    %420 = vmatpush1.bf16.msra.mxu0 0
    %421 = vmatprep.subr.bf16.mxu0 0
    %422 = vmatpush1.bf16.msra.mxu0 0
    %423 = vmatprep.mubr.bf16.mxu0 0
    %424 = vmatmul.mubr.bf16.gmra.mrb[0].mxu0 %v176
    %v425 = vpop.f32.mrb[0].mxu0
    %v426 = vadd.f32 %v214, %v425
    %v427 = vpop.f32.mrb[0].mxu0
    %v428 = vadd.f32 %v218, %v427
    %v429 = vpop.f32.mrb[0].mxu0
    %v430 = vpop.f32.mrb[0].mxu0
    %431 = vdwg.mxu0
    %432 = vmatprep.subr.bf16.mxu0 %v330
    %433 = vmatpush1.bf16.msra.mxu0 %v329
    %434 = vmatprep.subr.bf16.mxu0 %v334
    %435 = vmatpush1.bf16.msra.mxu0 %v333
    %436 = vmatprep.subr.bf16.mxu0 %v338
    %437 = vmatpush1.bf16.msra.mxu0 %v337
    %438 = vmatprep.subr.bf16.mxu0 %v342
    %439 = vmatpush1.bf16.msra.mxu0 %v341
    %440 = vmatprep.subr.bf16.mxu0 %v346
    %441 = vmatpush1.bf16.msra.mxu0 %v345
    %442 = vmatprep.subr.bf16.mxu0 %v350
    %443 = vmatpush1.bf16.msra.mxu0 %v349
    %444 = vmatprep.subr.bf16.mxu0 %v354
    %445 = vmatpush1.bf16.msra.mxu0 %v353
    %446 = vmatprep.subr.bf16.mxu0 %v358
    %447 = vmatpush1.bf16.msra.mxu0 %v357
    %448 = vmatprep.subr.bf16.mxu0 0
    %449 = vmatpush1.bf16.msra.mxu0 0
    %450 = vmatprep.subr.bf16.mxu0 0
    %451 = vmatpush1.bf16.msra.mxu0 0
    %452 = vmatprep.subr.bf16.mxu0 0
    %453 = vmatpush1.bf16.msra.mxu0 0
    %454 = vmatprep.subr.bf16.mxu0 0
    %455 = vmatpush1.bf16.msra.mxu0 0
    %456 = vmatprep.subr.bf16.mxu0 0
    %457 = vmatpush1.bf16.msra.mxu0 0
    %458 = vmatprep.subr.bf16.mxu0 0
    %459 = vmatpush1.bf16.msra.mxu0 0
    %460 = vmatprep.subr.bf16.mxu0 0
    %461 = vmatpush1.bf16.msra.mxu0 0
    %462 = vmatprep.subr.bf16.mxu0 0
    %463 = vmatpush1.bf16.msra.mxu0 0
    %464 = vmatprep.mubr.bf16.mxu0 0
    %465 = vmatmul.mubr.bf16.gmra.mrb[0].mxu0 %v176
    %v466 = vpop.f32.mrb[0].mxu0
    %v467 = vadd.f32 %v222, %v466
    %v468 = vpop.f32.mrb[0].mxu0
    %v469 = vadd.f32 %v226, %v468
    %v470 = vpop.f32.mrb[0].mxu0
    %v471 = vpop.f32.mrb[0].mxu0
    %472 = vdwg.mxu0
    %473 = vst [vmem:[#allocation8] sm:$0xff] %v426
    %474 = vst [vmem:[#allocation8 + $0x8] sm:$0xff] %v428
    %475 = vst [vmem:[#allocation8 + $0x10] sm:$0xff] %v467
    %476 = vst [vmem:[#allocation8 + $0x18] sm:$0xff] %v469
    // Predicated region
    $region34: #{tpu_custom_call.1} parent=1 // pred_check
      _
    $region35: #{tpu_custom_call.1} parent=1 // pred_check_branch
      %478 = sbr.rel (0) target = $region37
    $region36: #{tpu_custom_call.1} parent=1 // pred_region
      %s480 = ssub.s32 512, 512
      %481 = vsyncadd [#allocation4], %s480
      %s483 = sshll.u32 [#allocation8], 4
      %s484 = int_to_ptr.vmem [resolvable:$true] %s483
      %486 = dma.vmem_to_hbm [thread:$0]  %s484, 512, %s5, [#allocation4]
    $region37: #{tpu_custom_call.1} parent=1 // pred_fallthru
      _
    // Predicated region
    $region38: #{tpu_custom_call.1} parent=1 // pred_check
      _
    $region39: #{tpu_custom_call.1} parent=1 // pred_check_branch
      %488 = sbr.rel (0) target = $region41
    $region40: #{tpu_custom_call.1} parent=1 // pred_region
      %489 = dma.done [#allocation4], 512
    $region41: #{tpu_custom_call.1} parent=1 // pred_fallthru
      _
    %490 = vsyncpa [#allocation3], 1
    %491 = vsyncpa [#allocation6], 1
    %492 = vsyncpa [#allocation4], 1

</llo_original>
